<compile_context>
chip_gen: v5e
topology: v5e:2x2
jax: 0.10.0
libtpu: 0.0.40
codegen_flags: <defaults>
</compile_context>

<pallas_src>
import jax
import jax.numpy as jnp
from jax.experimental import pallas as pl
from jax.experimental.pallas import tpu as pltpu


def fusion_kernel(subidx_ref,   # scalar-prefetch (SMEM): (B,) int32, consumed by index_maps only
                  meg_ref,      # (1, Cp, tT) f32   MEG block (NCT; time = lane dim)
                  weff_ref,     # (1, D, Cp)  bf16  pre-fused (subject-mix @ 1x1 conv)^T
                  fb_ref,       # (1, D, 1)   f32   fMRI embedding + conv bias (hoisted)
                  out_ref):     # (1, D, tT)  out dtype, already in PyTorch (B, D, T) layout
    del subidx_ref  # used only by the weff index_map (data-dependent subject gather)
    # Cast MEG to bf16 on the VPU (hidden under the DMAs) instead of a separate
    # full-HBM convert pass in the wrapper.
    m = meg_ref[0].astype(jnp.bfloat16)
    # One MXU matmul per grid step: (D, Cp) x (Cp, tT) -> (D, tT), f32 accumulation.
    z = jnp.dot(weff_ref[0], m, preferred_element_type=jnp.float32)
    # Fusion: broadcast the fMRI embedding (+ conv bias) over the time lanes.
    out_ref[0] = (z + fb_ref[0]).astype(out_ref.dtype)


def _round_up(x, m):
    return (x + m - 1) // m * m


def _vmem_budget_bytes():
    """Usable scoped-VMEM budget on this chip (headroom left for Mosaic scratch)."""
    try:
        cap = int(pltpu.get_tpu_info().vmem_capacity_bytes)   # 64 MiB v7x, 128 MiB v5e/v6e
    except Exception:
        cap = 64 << 20                                        # conservative fallback
    return int(min(cap - (12 << 20), 100 << 20))


def _block_bytes(tT, Cp, D, out_bytes):
    """Double-buffered pipeline footprint of one grid step."""
    return 2 * (Cp * tT * 4        # meg block, f32
                + D * Cp * 2       # weff block, bf16
                + D * 4            # fb block, f32
                + D * tT * out_bytes)


def _pick_time_tile(Tp, Cp, D, out_bytes, budget, B):
    """Largest 128-multiple divisor of Tp whose pipelined footprint fits `budget`,
    preferring tiles that leave >= 2 total grid points (v7x has 2 TensorCores)."""
    divisors = [c for c in range(Tp, 0, -128) if Tp % c == 0]   # descending; 128 always present
    fitting = [c for c in divisors
               if _block_bytes(c, Cp, D, out_bytes) + (1 << 20) <= budget]
    if not fitting:
        fitting = [divisors[-1]]          # 128: smallest legal lane-aligned tile
    for c in fitting:
        if B * (Tp // c) >= 2:
            return c
    return fitting[0]


def fusion_forward(params, fmri, meg, subindex, out_dtype=jnp.bfloat16):
    # out_dtype=jnp.float32 gives exact-parity output at ~2x the writeback traffic.
    Wf, bf, subW, Pw, pb = params
    B, V = fmri.shape
    _, C, T = meg.shape
    S = subW.shape[0]
    D = Wf.shape[1]

    # ---- wrapper-side preparation (amortized, MXU/HBM friendly) -----------------
    # fMRI branch as one batched GEMM in f32; 1x1-conv bias pre-added.
    fb = (fmri.astype(jnp.float32) @ Wf.astype(jnp.float32)
          + bf[0] + pb[0]).reshape(B, D, 1).astype(jnp.float32)
    # Pre-fuse per-subject mixing with the shared 1x1 conv, transposed so the
    # kernel writes (D, T) blocks directly (no output transpose anywhere).
    weffT = jnp.einsum('sco,od->sdc', subW, Pw).astype(jnp.bfloat16)     # (S, D, C)
    # Clamp subject ids: they drive a data-dependent block DMA with no runtime
    # OOB check. (Silently remaps invalid ids — flag upstream if strict.)
    subindex = jnp.clip(subindex.astype(jnp.int32), 0, S - 1)

    # Channel padding: keep the contraction / sublane dim aligned (8 for small C,
    # 128 for large real-world C ~270-306 so the MXU contraction and weff lane
    # dim are unmasked). Zero columns contribute zero to the dot.
    Cp = _round_up(C, 128) if C >= 128 else _round_up(C, 8)
    if Cp != C:
        meg = jnp.pad(meg, ((0, 0), (0, Cp - C), (0, 0)))
        weffT = jnp.pad(weffT, ((0, 0), (0, 0), (0, Cp - C)))

    # Time padding: every store is a full, unmasked lane-dense vst (tail padded).
    Tp = _round_up(T, 128)
    if Tp != T:
        meg = jnp.pad(meg, ((0, 0), (0, 0), (0, Tp - T)))

    out_bytes = jnp.dtype(out_dtype).itemsize
    budget = _vmem_budget_bytes()
    tT = _pick_time_tile(Tp, Cp, D, out_bytes, budget, B)
    n_t = Tp // tT
    vmem_limit = int(min(max(_block_bytes(tT, Cp, D, out_bytes) + (1 << 20), 16 << 20),
                         budget))

    # b is the OUTER grid axis: the subject-weight block index only changes at
    # batch boundaries, so Pallas skips its re-fetch for all n_t inner steps.
    grid_spec = pltpu.PrefetchScalarGridSpec(
        num_scalar_prefetch=1,                      # subindex -> SMEM, feeds index_maps
        grid=(B, n_t),
        in_specs=[
            pl.BlockSpec((1, Cp, tT), lambda b, t, sub: (b, 0, t)),        # meg (NCT, f32)
            pl.BlockSpec((1, D, Cp),  lambda b, t, sub: (sub[b], 0, 0)),   # fused subject weight
            pl.BlockSpec((1, D, 1),   lambda b, t, sub: (b, 0, 0)),        # fMRI emb + bias
        ],
        out_specs=pl.BlockSpec((1, D, tT), lambda b, t, sub: (b, 0, t)),
    )

    out = pl.pallas_call(
        fusion_kernel,
        grid_spec=grid_spec,
        out_shape=jax.ShapeDtypeStruct((B, D, Tp), out_dtype),
        compiler_params=pltpu.CompilerParams(
            dimension_semantics=("parallel", "parallel"),
            vmem_limit_bytes=vmem_limit,
        ),
    )(subindex, meg, weffT, fb)

    return out[:, :, :T] if Tp != T else out


def fusion_reference(params, fmri, meg, subindex):
    """Pure-JAX (f32) reference mirroring the assumed PyTorch semantics (NCT layout)."""
    Wf, bf, subW, Pw, pb = params
    f = fmri @ Wf + bf[0]                                        # (B, D)
    Wsub = subW[subindex]                                        # (B, C_in, C_out)
    y = jnp.einsum('bct,bco->bot', meg, Wsub)                    # (B, C_out, T)
    z = jnp.einsum('bot,od->bdt', y, Pw) + pb[0][None, :, None]  # (B, D, T)
    return f[:, :, None] + z


if __name__ == "__main__":
    # batch, fMRI voxels, hidden, MEG chans, time, subjects
    B, V, D, C, T, S = 2, 32, 16, 8, 384, 4   # T=384 exercises padding-free 128-aligned tiling

    key = jax.random.PRNGKey(0)
    kf, km, ks, k1, k2, k3, k4, k5 = jax.random.split(key, 8)
    fmri = jax.random.normal(kf, (B, V), jnp.float32)
    meg = jax.random.normal(km, (B, C, T), jnp.float32)
    subindex = jax.random.randint(ks, (B,), 0, S, jnp.int32)

    # deterministic synthetic parameters
    Wf   = jax.random.normal(k1, (V, D), jnp.float32) * 0.1     # fMRI linear weight
    bf   = jax.random.normal(k2, (1, D), jnp.float32) * 0.1     # fMRI linear bias
    subW = jax.random.normal(k3, (S, C, C), jnp.float32) * 0.1  # per-subject mixing (C_in, C_out)
    Pw   = jax.random.normal(k4, (C, D), jnp.float32) * 0.1     # 1x1 conv weight (C -> D)
    pb   = jax.random.normal(k5, (1, D), jnp.float32) * 0.1     # 1x1 conv bias
    params = (Wf, bf, subW, Pw, pb)

    out = fusion_forward(params, fmri, meg, subindex)            # bf16 output by default
    out = jax.block_until_ready(out)

    ref = fusion_reference(params, fmri, meg, subindex)
    assert out.shape == (B, D, T), out.shape
    # bf16 operands + bf16 output (f32 MXU accumulation) vs f32 reference
    err = jnp.max(jnp.abs(out.astype(jnp.float32) - ref))
    assert jnp.allclose(out.astype(jnp.float32), ref, atol=3e-2, rtol=3e-2), float(err)
    print("KERNEL_OK")
</pallas_src>

<mosaic_0001>
module attributes {stable_mosaic.version = 11 : i64} {
  func.func @fusion_kernel(%arg0: i32, %arg1: i32, %arg2: memref<2xi32, #tpu.memory_space<smem>>, %arg3: memref<1x8x384xf32, #tpu.memory_space<vmem>>, %arg4: memref<1x16x8xbf16, #tpu.memory_space<vmem>>, %arg5: memref<1x16x1xf32, #tpu.memory_space<vmem>>, %arg6: memref<1x16x384xbf16, #tpu.memory_space<vmem>>) attributes {dimension_semantics = [#tpu.dimension_semantics<parallel>, #tpu.dimension_semantics<parallel>], iteration_bounds = array<i64: 2, 1>, scalar_prefetch = 1 : i64, scratch_operands = 0 : i64, tpu.core_type = #tpu.core_type<tc>, window_params = [{transform_indices = @transform_0, window_bounds = array<i64: 1, 8, 384>}, {transform_indices = @transform_1, window_bounds = array<i64: 1, 16, 8>}, {transform_indices = @transform_2, window_bounds = array<i64: 1, 16, 1>}, {transform_indices = @transform_3, window_bounds = array<i64: 1, 16, 384>}]} {
    %c0 = arith.constant 0 : index
    %c0_0 = arith.constant 0 : index
    %c0_1 = arith.constant 0 : index
    %0 = vector.load %arg3[%c0, %c0_0, %c0_1] : memref<1x8x384xf32, #tpu.memory_space<vmem>>, vector<1x8x384xf32>
    %1 = vector.shape_cast %0 : vector<1x8x384xf32> to vector<8x384xf32>
    %2 = arith.truncf %1 : vector<8x384xf32> to vector<8x384xbf16>
    %c0_2 = arith.constant 0 : index
    %c0_3 = arith.constant 0 : index
    %c0_4 = arith.constant 0 : index
    %3 = vector.load %arg4[%c0_2, %c0_3, %c0_4] : memref<1x16x8xbf16, #tpu.memory_space<vmem>>, vector<1x16x8xbf16>
    %4 = vector.shape_cast %3 : vector<1x16x8xbf16> to vector<16x8xbf16>
    %cst = arith.constant dense<0.000000e+00> : vector<16x384xf32>
    %5 = tpu.matmul %4, %2, %cst {dimension_numbers = #tpu.dot_dimension_numbers<[1], [0], [0], [1], [0, 0, 1, 1], [], []>} : vector<16x8xbf16>, vector<8x384xbf16>, vector<16x384xf32> -> vector<16x384xf32>
    %c0_5 = arith.constant 0 : index
    %c0_6 = arith.constant 0 : index
    %c0_7 = arith.constant 0 : index
    %6 = vector.load %arg5[%c0_5, %c0_6, %c0_7] : memref<1x16x1xf32, #tpu.memory_space<vmem>>, vector<1x16x1xf32>
    %7 = vector.shape_cast %6 : vector<1x16x1xf32> to vector<16x1xf32>
    %8 = vector.broadcast %7 : vector<16x1xf32> to vector<16x384xf32>
    %9 = arith.addf %5, %8 : vector<16x384xf32>
    %10 = arith.truncf %9 : vector<16x384xf32> to vector<16x384xbf16>
    %c0_8 = arith.constant 0 : index
    %c0_9 = arith.constant 0 : index
    %c0_10 = arith.constant 0 : index
    %11 = vector.load %arg6[%c0_8, %c0_9, %c0_10] : memref<1x16x384xbf16, #tpu.memory_space<vmem>>, vector<1x16x384xbf16>
    %12 = vector.shape_cast %11 : vector<1x16x384xbf16> to vector<16x384xbf16>
    %13 = vector.shape_cast %10 : vector<16x384xbf16> to vector<1x16x384xbf16>
    tpu.vector_store %arg6[%c0_8, %c0_9, %c0_10], %13 {strides = array<i32>} : memref<1x16x384xbf16, #tpu.memory_space<vmem>>, vector<1x16x384xbf16>,
    return
  }
  func.func @transform_0(%arg0: i32, %arg1: i32, %arg2: memref<2xi32, #tpu.memory_space<smem>>) -> (i32, i32, i32) {
    %c0_i32 = arith.constant 0 : i32
    %c0_i32_0 = arith.constant 0 : i32
    return %arg0, %c0_i32, %arg1 : i32, i32, i32
  }
  func.func @transform_1(%arg0: i32, %arg1: i32, %arg2: memref<2xi32, #tpu.memory_space<smem>>) -> (i32, i32, i32) {
    %0 = arith.index_cast %arg0 : i32 to index
    %1 = memref.load %arg2[%0] : memref<2xi32, #tpu.memory_space<smem>>
    %c0_i32 = arith.constant 0 : i32
    %c0_i32_0 = arith.constant 0 : i32
    %c0_i32_1 = arith.constant 0 : i32
    return %1, %c0_i32, %c0_i32_0 : i32, i32, i32
  }
  func.func @transform_2(%arg0: i32, %arg1: i32, %arg2: memref<2xi32, #tpu.memory_space<smem>>) -> (i32, i32, i32) {
    %c0_i32 = arith.constant 0 : i32
    %c0_i32_0 = arith.constant 0 : i32
    %c0_i32_1 = arith.constant 0 : i32
    return %arg0, %c0_i32, %c0_i32_0 : i32, i32, i32
  }
  func.func @transform_3(%arg0: i32, %arg1: i32, %arg2: memref<2xi32, #tpu.memory_space<smem>>) -> (i32, i32, i32) {
    %c0_i32 = arith.constant 0 : i32
    %c0_i32_0 = arith.constant 0 : i32
    return %arg0, %c0_i32, %arg1 : i32, i32, i32
  }
}

</mosaic_0001>

<llo_original>
// kernel: tpu_custom_call.1
$region0: #{tpu_custom_call.1}
  #allocation0 [shape = 'u32[]', space=smem, size = 0x4, offset = 0x4, fixed_abs, tag = 'smem constant byte address 0x4 - core index']
  #allocation1 [shape = 'u32[72,128]{1,0:T(1,128)}', space=vmem, size = 0x9000, scoped, tag = 'internal scratch']
  #allocation2 [shape = 's32[1]{0}', space=sflag, size = 0x4, scoped, tag = 'scoped memory for tpu_custom_call.1']
  #allocation3 [shape = 'u8[512]{0}', space=smem, size = 0x200, scoped, tag = 'prefetched SMEM operand 0']
  %s0 = inlined_call_operand.vmem [shape: s32[2], index: 0, kind: input, shape index: {}]
  %s1 = inlined_call_operand.vmem [shape: f32[2,8,384], index: 1, kind: input, shape index: {}]
  %s2 = inlined_call_operand.vmem [shape: bf16[4,16,8], index: 2, kind: input, shape index: {}]
  %s3 = inlined_call_operand.vmem [shape: f32[2,16,1], index: 3, kind: input, shape index: {}]
  %s4 = inlined_call_operand.hbm [shape: bf16[2,16,384], index: 4, kind: output, shape index: {}]
  %s5 = sld [smem:[#allocation0]]
  $region45: #{tpu_custom_call.1} parent=0
    _
  %s7 = ssub.s32 1, %s5
  %s8 = scalar_select 0, %s7, %s5
  %s10 = sshll.u32 %s0, 4
  %s11 = int_to_ptr.vmem [resolvable:$true] %s10
  %13 = dma.vmem_to_smem %s11, 16, [#allocation3], [#allocation2]
  %15 = dma.done [#allocation2], 16
  %16 = sfence
  $region1: #{tpu_custom_call.1} parent=0
    #allocation4 [shape = 'u8[24576]{0}', space=vmem, size = 0x6000, scoped, tag = 'output window, operand 0']
    #allocation5 [shape = 's32[2]{0}', space=sflag, size = 0x8, scoped, tag = 'scoped memory for tpu_custom_call.1']
    %17 = vsyncpa [#allocation5], 0
    %s18 = scalar_lea.sflag [#allocation5], 1
    %19 = vsyncpa %s18, 0
    loop: start=0, step=1, limit=4
    $region2: #{tpu_custom_call.1} parent=1 // loop_pre_header
      _
    $region3: #{tpu_custom_call.1} parent=1 // loop_header
      %s21 = sphi 0, %s25
      %p22 = scmp.ge.s32.totalorder %s21, 4
      %s28 = sphi 0, %s40
      %s29 = sphi 0, %s36
      %s30 = sphi 0, %s28
      %s31 = sphi 0, %s29
      %s32 = sphi 0, %s30
      %s33 = sphi 0, %s31
      %s45 = sphi 0, %s47
      %s48 = sphi 0, %s45
      %s49 = sphi 0, %s48
      %s65 = sphi 0, %s49
      %s73 = sphi 0, %s75
      %s76 = sphi 0, %s73
      %s77 = sphi 0, %s76
      %s93 = sphi 0, %s77
      %s99 = sphi 0, %s101
      %s102 = sphi 0, %s99
      %s103 = sphi 0, %s102
      %s119 = sphi 0, %s103
      %s127 = sphi 0, %s129
      %s130 = sphi 0, %s127
      %s131 = sphi 0, %s130
      %s147 = sphi 0, %s131
    $region4: #{tpu_custom_call.1} parent=1 // loop_header_branch
      %24 = sbr.rel (%p22) target = $region8
    $region5: #{tpu_custom_call.1} parent=1 // loop_body
      %s26 = ssub.s32 %s21, 1
      %s27 = ssub.s32 %s21, 2
      %s34 = sadd.s32 1, %s29
      %p35 = scmp.ge.s32.totalorder %s34, 1
      %s36 = scalar_select %p35, 0, %s34
      %s37 = sadd.s32 1, %s28
      %s38 = scalar_select %p35, %s37, %s28
      %p39 = scmp.ge.s32.totalorder %s38, 2
      %s40 = scalar_select %p39, 0, %s38
      %s41 = ssub.s32 %s28, %s40
      %s42 = ssub.s32 %s29, %s36
      %s43 = sor.u32 %s41, %s42
      %p44 = scmp.eq.s32.totalorder %s43, 0
      %s46 = sadd.s32 %s45, 1
      %s47 = scalar_select %p44, %s45, %s46
      %p50 = pneg %p44
      %p51 = scmp.eq.s32.totalorder %s21, 1
      %p52 = por %p50, %p51
      %p53 = scmp.ne.s32.totalorder %s45, %s48
      %p54 = scmp.eq.s32.totalorder %s21, 0
      %p55 = por %p53, %p54
      %p56 = scmp.ne.s32.totalorder %s45, %s48
      %p57 = scmp.eq.s32.totalorder %s26, 1
      %p58 = por %p56, %p57
      %p59 = scmp.ne.s32.totalorder %s48, %s49
      %p60 = scmp.eq.s32.totalorder %s26, 0
      %p61 = por %p59, %p60
      %p62 = scmp.ne.s32.totalorder %s48, %s49
      %p63 = scmp.eq.s32.totalorder %s27, 1
      %p64 = por %p62, %p63
      %p66 = scmp.ne.s32.totalorder %s49, %s65
      %p67 = scmp.eq.s32.totalorder %s27, 0
      %p68 = por %p66, %p67
      %s69 = sld [smem:[#allocation3 + %s28]]
      %s70 = sld [smem:[#allocation3 + %s40]]
      %s71 = ssub.s32 %s69, %s70
      %p72 = scmp.eq.s32.totalorder %s71, 0
      %s74 = sadd.s32 %s73, 1
      %s75 = scalar_select %p72, %s73, %s74
      %p78 = pneg %p72
      %p79 = scmp.eq.s32.totalorder %s21, 1
      %p80 = por %p78, %p79
      %p81 = scmp.ne.s32.totalorder %s73, %s76
      %p82 = scmp.eq.s32.totalorder %s21, 0
      %p83 = por %p81, %p82
      %p84 = scmp.ne.s32.totalorder %s73, %s76
      %p85 = scmp.eq.s32.totalorder %s26, 1
      %p86 = por %p84, %p85
      %p87 = scmp.ne.s32.totalorder %s76, %s77
      %p88 = scmp.eq.s32.totalorder %s26, 0
      %p89 = por %p87, %p88
      %p90 = scmp.ne.s32.totalorder %s76, %s77
      %p91 = scmp.eq.s32.totalorder %s27, 1
      %p92 = por %p90, %p91
      %p94 = scmp.ne.s32.totalorder %s77, %s93
      %p95 = scmp.eq.s32.totalorder %s27, 0
      %p96 = por %p94, %p95
      %s97 = ssub.s32 %s28, %s40
      %p98 = scmp.eq.s32.totalorder %s97, 0
      %s100 = sadd.s32 %s99, 1
      %s101 = scalar_select %p98, %s99, %s100
      %p104 = pneg %p98
      %p105 = scmp.eq.s32.totalorder %s21, 1
      %p106 = por %p104, %p105
      %p107 = scmp.ne.s32.totalorder %s99, %s102
      %p108 = scmp.eq.s32.totalorder %s21, 0
      %p109 = por %p107, %p108
      %p110 = scmp.ne.s32.totalorder %s99, %s102
      %p111 = scmp.eq.s32.totalorder %s26, 1
      %p112 = por %p110, %p111
      %p113 = scmp.ne.s32.totalorder %s102, %s103
      %p114 = scmp.eq.s32.totalorder %s26, 0
      %p115 = por %p113, %p114
      %p116 = scmp.ne.s32.totalorder %s102, %s103
      %p117 = scmp.eq.s32.totalorder %s27, 1
      %p118 = por %p116, %p117
      %p120 = scmp.ne.s32.totalorder %s103, %s119
      %p121 = scmp.eq.s32.totalorder %s27, 0
      %p122 = por %p120, %p121
      %s123 = ssub.s32 %s28, %s40
      %s124 = ssub.s32 %s29, %s36
      %s125 = sor.u32 %s123, %s124
      %p126 = scmp.eq.s32.totalorder %s125, 0
      %s128 = sadd.s32 %s127, 1
      %s129 = scalar_select %p126, %s127, %s128
      %p132 = pneg %p126
      %p133 = scmp.eq.s32.totalorder %s21, 1
      %p134 = por %p132, %p133
      %p135 = scmp.ne.s32.totalorder %s127, %s130
      %p136 = scmp.eq.s32.totalorder %s21, 0
      %p137 = por %p135, %p136
      %p138 = scmp.ne.s32.totalorder %s127, %s130
      %p139 = scmp.eq.s32.totalorder %s26, 1
      %p140 = por %p138, %p139
      %p141 = scmp.ne.s32.totalorder %s130, %s131
      %p142 = scmp.eq.s32.totalorder %s26, 0
      %p143 = por %p141, %p142
      %p144 = scmp.ne.s32.totalorder %s130, %s131
      %p145 = scmp.eq.s32.totalorder %s27, 1
      %p146 = por %p144, %p145
      %p148 = scmp.ne.s32.totalorder %s131, %s147
      %p149 = scmp.eq.s32.totalorder %s27, 0
      %p150 = por %p148, %p149
      %p151 = scmp.le.s32.totalorder 1, %s21
      %p152 = scmp.lt.s32.totalorder %s21, 3
      %p153 = pnand %p151, %p152
      %p154 = pneg %p153
      // Predicated region
      $region9: #{tpu_custom_call.1} parent=5 // pred_check
        _
      $region10: #{tpu_custom_call.1} parent=5 // pred_check_branch
        %156 = sbr.rel (%p153) target = $region12
      $region11: #{tpu_custom_call.1} parent=5 // pred_region
        %s157 = ssub.s32 %s21, 1
      $region12: #{tpu_custom_call.1} parent=5 // pred_fallthru
        _
      %p158 = scmp.lt.s32.totalorder %s21, 2
      // Predicated region
      $region13: #{tpu_custom_call.1} parent=5 // pred_check
        %p159 = pneg %p158
      $region14: #{tpu_custom_call.1} parent=5 // pred_check_branch
        %161 = sbr.rel (%p159) target = $region16
      $region15: #{tpu_custom_call.1} parent=5 // pred_region
        // Predicated region
        $region17: #{tpu_custom_call.1} parent=15 // pred_check
          %p162 = pneg %p55
        $region18: #{tpu_custom_call.1} parent=15 // pred_check_branch
          %164 = sbr.rel (%p162) target = $region20
        $region19: #{tpu_custom_call.1} parent=15 // pred_region
          %s165 = smul.u32 3, %s29
          %p166 = scmp.lt.s32.totalorder %s28, 1
          %s167 = scalar_select %p166, %s28, 1
          %p168 = scmp.lt.s32.totalorder %s165, 2
          %s169 = scalar_select %p168, %s165, 2
          %s170 = smul.addr %s167, 3
          %s171 = sadd.s32 %s169, %s170
          %s172 = smul.addr %s171, 8
          %s173 = scalar_lea.vmem %s1, %s172
          %s174 = smul.u32 3, %s29
        $region20: #{tpu_custom_call.1} parent=15 // pred_fallthru
          _
        // Predicated region
        $region21: #{tpu_custom_call.1} parent=15 // pred_check
          %p175 = pneg %p83
        $region22: #{tpu_custom_call.1} parent=15 // pred_check_branch
          %177 = sbr.rel (%p175) target = $region24
        $region23: #{tpu_custom_call.1} parent=15 // pred_region
          %s178 = sld [smem:[#allocation3 + %s28]]
          %p179 = scmp.lt.s32.totalorder %s178, 3
          %s180 = scalar_select %p179, %s178, 3
          %s181 = smul.addr %s180, 2
          %s182 = smul.addr %s181, 4
          %s183 = scalar_lea.vmem %s2, %s182
          %s184 = sld [smem:[#allocation3 + %s28]]
        $region24: #{tpu_custom_call.1} parent=15 // pred_fallthru
          _
        // Predicated region
        $region25: #{tpu_custom_call.1} parent=15 // pred_check
          %p185 = pneg %p109
        $region26: #{tpu_custom_call.1} parent=15 // pred_check_branch
          %187 = sbr.rel (%p185) target = $region28
        $region27: #{tpu_custom_call.1} parent=15 // pred_region
          %p188 = scmp.lt.s32.totalorder %s28, 1
          %s189 = scalar_select %p188, %s28, 1
          %s190 = smul.addr %s189, 2
          %s191 = smul.addr %s190, 8
          %s192 = scalar_lea.vmem %s3, %s191
        $region28: #{tpu_custom_call.1} parent=15 // pred_fallthru
          _
      $region16: #{tpu_custom_call.1} parent=5 // pred_fallthru
        _
      %p193 = scmp.le.s32.totalorder 1, %s21
      %p194 = scmp.lt.s32.totalorder %s21, 3
      %p195 = pnand %p193, %p194
      %p196 = pneg %p195
      // Predicated region
      $region29: #{tpu_custom_call.1} parent=5 // pred_check
        _
      $region30: #{tpu_custom_call.1} parent=5 // pred_check_branch
        %198 = sbr.rel (%p195) target = $region32
      $region31: #{tpu_custom_call.1} parent=5 // pred_region
        %s199 = ssub.s32 %s21, 1
        %s200 = smul.u32 3, %s31
        %p201 = scmp.lt.s32.totalorder %s30, 1
        %s202 = scalar_select %p201, %s30, 1
        %p203 = scmp.lt.s32.totalorder %s200, 2
        %s204 = scalar_select %p203, %s200, 2
        %s205 = smul.addr %s202, 3
        %s206 = sadd.s32 %s204, %s205
        %s207 = smul.addr %s206, 8
        %s208 = scalar_lea.vmem %s1, %s207
        %p209 = pneg %p61
        %p210 = pneg %p58
        %s211 = sld [smem:[#allocation3 + %s30]]
        %p212 = scmp.lt.s32.totalorder %s211, 3
        %s213 = scalar_select %p212, %s211, 3
        %s214 = smul.addr %s213, 2
        %s215 = smul.addr %s214, 4
        %s216 = scalar_lea.vmem %s2, %s215
        %p217 = pneg %p89
        %p218 = pneg %p86
        %p219 = scmp.lt.s32.totalorder %s30, 1
        %s220 = scalar_select %p219, %s30, 1
        %s221 = smul.addr %s220, 2
        %s222 = smul.addr %s221, 8
        %s223 = scalar_lea.vmem %s3, %s222
        %p224 = pneg %p115
        %p225 = pneg %p112
        %p226 = pneg %p143
        %p227 = pneg %p140
        %s228 = sand.u32 %s130, 1
        %s229 = scalar_lea.sflag [#allocation5], %s228
        %s230 = sand.u32 %s130, 1
        %s231 = smul.addr %s230, 24
        %s232 = scalar_lea.vmem [#allocation4], %s231
        %s233 = smul.u32 3, %s31
        %p234 = scmp.lt.s32.totalorder %s30, 1
        %s235 = scalar_select %p234, %s30, 1
        %p236 = scmp.lt.s32.totalorder %s233, 2
        %s237 = scalar_select %p236, %s233, 2
        %s238 = smul.addr %s235, 3
        %s239 = sadd.s32 %s237, %s238
        %s240 = smul.addr %s239, 8
        %s241 = scalar_lea.vmem %s1, %s240
        %s242 = smul.u32 3, %s31
        %s243 = sld [smem:[#allocation3 + %s30]]
        %p244 = scmp.lt.s32.totalorder %s243, 3
        %s245 = scalar_select %p244, %s243, 3
        %s246 = smul.addr %s245, 2
        %s247 = smul.addr %s246, 4
        %s248 = scalar_lea.vmem %s2, %s247
        %s249 = sld [smem:[#allocation3 + %s30]]
        %p250 = scmp.lt.s32.totalorder %s30, 1
        %s251 = scalar_select %p250, %s30, 1
        %s252 = smul.addr %s251, 2
        %s253 = smul.addr %s252, 8
        %s254 = scalar_lea.vmem %s3, %s253
        %s255 = smul.u32 3, %s31
        %v257 = vld [vmem:[%s241] sm:$0xff]
        %v258 = vld [vmem:[%s241 + $0x8] sm:$0xff]
        %v259 = vld [vmem:[%s241 + $0x10] sm:$0xff]
        %v260 = vpack.c.bf16 %v257, %v257
        %v261 = vpack.c.bf16 %v258, %v258
        %v262 = vpack.c.bf16 %v259, %v259
        %v263 = vld [vmem:[%s248] sm:$0xf]
        %v264 = vld [vmem:[%s248 + $0x4] sm:$0xf]
        %v265 = vld [vmem:[%s254] sm:$0xff]
        %v266 = vld [vmem:[%s254 + $0x8] sm:$0xff]
        %268 = vset.pattern.permute.xlu0 0
        %269 = vperm.xlu0 %268, %v265
        %v270 = vpop.permute.xlu0 %269
        %273 = vset.pattern.permute.xlu0 0
        %274 = vperm.xlu0 %273, %v266
        %v275 = vpop.permute.xlu0 %274
        %v279 = vunpack.c.l.b16 %v263
        %v280 = vunpack.c.l.b16 %v264
        %v281 = vpack.c.b16 %v280, %v279
        %vm282 = vcmask 64512
        %v284 = vsel %vm282, %v281, 0
        %vm286 = vcmask 1043456
        %v288 = vsel %vm286, %v260, 0
        %v291 = vsel %vm286, %v261, 0
        %v294 = vsel %vm286, %v262, 0
        %296 = vmatpush.bf16.msra.mxu0 0
        %297 = vmatpush.bf16.msra.mxu0 0
        %298 = vmatpush.bf16.msra.mxu0 0
        %299 = vmatpush.bf16.msra.mxu0 0
        %300 = vmatpush.bf16.msra.mxu0 0
        %301 = vmatpush.bf16.msra.mxu0 0
        %302 = vmatpush.bf16.msra.mxu0 0
        %303 = vmatpush.bf16.msra.mxu0 %v288
        %304 = vmatmul.bf16.gmra.mxu0 %v284
        %v305 = vpop.f32.mrf.mxu0
        %v306 = vadd.f32 %v270, %v305
        %v307 = vpop.f32.mrf.mxu0
        %v308 = vadd.f32 %v275, %v307
        %309 = vdwg.mxu0
        %310 = vmatpush.bf16.msra.mxu0 0
        %311 = vmatpush.bf16.msra.mxu0 0
        %312 = vmatpush.bf16.msra.mxu0 0
        %313 = vmatpush.bf16.msra.mxu0 0
        %314 = vmatpush.bf16.msra.mxu0 0
        %315 = vmatpush.bf16.msra.mxu0 0
        %316 = vmatpush.bf16.msra.mxu0 0
        %317 = vmatpush.bf16.msra.mxu0 %v291
        %318 = vmatmul.bf16.gmra.mxu0 %v284
        %v319 = vpop.f32.mrf.mxu0
        %v320 = vadd.f32 %v270, %v319
        %v321 = vpop.f32.mrf.mxu0
        %v322 = vadd.f32 %v275, %v321
        %323 = vdwg.mxu0
        %324 = vmatpush.bf16.msra.mxu0 0
        %325 = vmatpush.bf16.msra.mxu0 0
        %326 = vmatpush.bf16.msra.mxu0 0
        %327 = vmatpush.bf16.msra.mxu0 0
        %328 = vmatpush.bf16.msra.mxu0 0
        %329 = vmatpush.bf16.msra.mxu0 0
        %330 = vmatpush.bf16.msra.mxu0 0
        %331 = vmatpush.bf16.msra.mxu0 %v294
        %332 = vmatmul.bf16.gmra.mxu0 %v284
        %v333 = vpop.f32.mrf.mxu0
        %v334 = vadd.f32 %v270, %v333
        %v335 = vpop.f32.mrf.mxu0
        %v336 = vadd.f32 %v275, %v335
        %337 = vdwg.mxu0
        %v338 = vpack.c.bf16 %v320, %v306
        %v339 = vpack.c.bf16 %v334, %v334
        %v340 = vpack.c.bf16 %v322, %v308
        %v341 = vpack.c.bf16 %v336, %v336
        %342 = vst [vmem:[%s232] sm:$0xff] %v338
        %343 = vst [vmem:[%s232 + $0x8] sm:$0xf] %v339
        %344 = vst [vmem:[%s232 + $0xc] sm:$0xff] %v340
        %345 = vst [vmem:[%s232 + $0x14] sm:$0xf] %v341
        %s346 = sand.u32 %s130, 1
        %s347 = scalar_lea.sflag [#allocation5], %s346
        %s348 = sand.u32 %s130, 1
        %s349 = smul.addr %s348, 24
        %s350 = scalar_lea.vmem [#allocation4], %s349
        // Predicated region
        $region33: #{tpu_custom_call.1} parent=31 // pred_check
          %p351 = pneg %p140
        $region34: #{tpu_custom_call.1} parent=31 // pred_check_branch
          %353 = sbr.rel (%p351) target = $region36
        $region35: #{tpu_custom_call.1} parent=31 // pred_region
          %s354 = smul.u32 3, %s31
          %356 = vsyncadd %s347, 0
          %s357 = smul.addr %s30, 6
          %s358 = sadd.s32 %s354, %s357
          %s359 = smul.addr %s358, 4
          %s360 = scalar_lea.hbm %s4, %s359
          %s361 = sshll.u32 %s350, 4
          %s362 = int_to_ptr.vmem [resolvable:$true] %s361
          %s363 = sshll.u32 %s360, 4
          %s364 = int_to_ptr.hbm [resolvable:$true] %s363
          %369 = dma.vmem_to_hbm [thread:$0]  %s362, 384, %s364, %s347, 192, 192, 12
        $region36: #{tpu_custom_call.1} parent=31 // pred_fallthru
          _
      $region32: #{tpu_custom_call.1} parent=5 // pred_fallthru
        _
      %p370 = scmp.le.s32.totalorder 2, %s21
      // Predicated region
      $region37: #{tpu_custom_call.1} parent=5 // pred_check
        %p371 = pneg %p370
      $region38: #{tpu_custom_call.1} parent=5 // pred_check_branch
        %373 = sbr.rel (%p371) target = $region40
      $region39: #{tpu_custom_call.1} parent=5 // pred_region
        %s374 = ssub.s32 %s21, 2
        // Predicated region
        $region41: #{tpu_custom_call.1} parent=39 // pred_check
          %p375 = pneg %p146
        $region42: #{tpu_custom_call.1} parent=39 // pred_check_branch
          %377 = sbr.rel (%p375) target = $region44
        $region43: #{tpu_custom_call.1} parent=39 // pred_region
          %s378 = sand.u32 %s131, 1
          %s379 = scalar_lea.sflag [#allocation5], %s378
          %s380 = sand.u32 %s131, 1
          %s381 = smul.addr %s380, 24
          %s382 = scalar_lea.vmem [#allocation4], %s381
          %384 = dma.done %s379, 384
        $region44: #{tpu_custom_call.1} parent=39 // pred_fallthru
          _
      $region40: #{tpu_custom_call.1} parent=5 // pred_fallthru
        _
    $region6: #{tpu_custom_call.1} parent=1 // loop_footer
      %s25 = sadd.s32 1, %s21
    $region7: #{tpu_custom_call.1} parent=1 // loop_footer_branch
      %20 = sbr.rel target = $region3
    $region8: #{tpu_custom_call.1} parent=1 // loop_exit
      _
    %385 = vsyncpa [#allocation5], 1
    %s386 = scalar_lea.sflag [#allocation5], 1
    %387 = vsyncpa %s386, 1

</llo_original>
